<compile_context>
chip_gen: v7x
topology: tpu7x:2x2x1
jax: 0.10.0
libtpu: 0.0.40
codegen_flags: <defaults>
</compile_context>

<pallas_src>
import jax
import jax.numpy as jnp
import numpy as np
from jax.experimental import pallas as pl
from jax.experimental.pallas import tpu as pltpu


_LANE = 128
_TILE_VMEM_BUDGET = 24 * 1024 * 1024   # target per-step working set (bytes)
_VMEM_LIMIT = 32 * 1024 * 1024         # safe on v5e/v6e (128 MiB) and v7x (64 MiB)
_SPLIT_THRESHOLD = 4096                # lanes; above this keep >=2 tiles (v7x: 2 TCs)


def _round_up(x, m):
    return ((x + m - 1) // m) * m


def _choose_tiling(n, cin, cout, hw, bytes_per_elem):
    """Pick (batch-per-block, spatial tile, #spatial tiles, padded HW)."""
    hw_pad = _round_up(hw, _LANE)

    # Fold a small batch entirely into the block (fewer, fatter grid steps);
    # large batches stay on a parallel grid axis.
    n_b = n if n <= 8 else 1

    # Per-step VMEM: x + out double-buffered per lane, plus resident weights/bias.
    fixed = 2 * (cout * cin + cout) * bytes_per_elem
    per_lane = 2 * n_b * (cin + cout) * bytes_per_elem
    raw = (_TILE_VMEM_BUDGET - fixed) // per_lane
    if raw < _LANE and n_b > 1:
        # Folded batch too fat for even one 128-lane tile -> un-fold it.
        n_b = 1
        per_lane = 2 * (cin + cout) * bytes_per_elem
        raw = (_TILE_VMEM_BUDGET - fixed) // per_lane
    t_budget = max(_LANE, (raw // _LANE) * _LANE)

    if hw_pad <= t_budget:
        # Whole (padded) image fits in one tile.  Split into 2 only when it is
        # big enough that per-step overhead is amortized (keeps both v7x TCs busy).
        n_tiles = 2 if hw_pad >= _SPLIT_THRESHOLD else 1
        t_hw = _round_up(-(-hw_pad // n_tiles), _LANE)
    else:
        t_hw = t_budget
        n_tiles = -(-hw_pad // t_hw)

    hw_alloc = n_tiles * t_hw
    return n_b, t_hw, n_tiles, hw_alloc


def outconv_kernel(x_ref, w_ref, b_ref, o_ref):
    # x_ref: (n_b, Cin, T)  w_ref: (Cout, Cin)  b_ref: (Cout, 1)  o_ref: (n_b, Cout, T)
    w = w_ref[...]
    b = b_ref[...].astype(jnp.float32)
    # Static loop over the (small) folded batch: one MXU matmul per image.
    for i in range(x_ref.shape[0]):
        y = jnp.dot(w, x_ref[i], preferred_element_type=jnp.float32)
        o_ref[i] = (y + b).astype(o_ref.dtype)


def outconv(x_nchw, weight, bias):
    """1x1 Conv2d (OutConv).

    x_nchw: (N, Cin, H, W)   weight: (Cout, Cin, 1, 1)   bias: (Cout,)
    Returns (N, Cout, H, W).
    """
    N, Cin, H, W = x_nchw.shape
    Cout = weight.shape[0]
    HW = H * W
    bytes_per_elem = jnp.dtype(x_nchw.dtype).itemsize

    n_b, t_hw, n_tiles, hw_alloc = _choose_tiling(N, Cin, Cout, HW, bytes_per_elem)

    # Lane-dense layout: spatial on lanes, channels on sublanes.
    x2 = x_nchw.reshape(N, Cin, HW)
    if hw_alloc != HW:
        # Pad the lane axis so every tile is full-width (unmasked stores);
        # the padded columns are sliced off after the call.
        x2 = jnp.pad(x2, ((0, 0), (0, 0), (0, hw_alloc - HW)))
    w2 = weight.reshape(Cout, Cin)
    b2 = bias.reshape(Cout, 1)

    grid = (N // n_b, n_tiles)

    cost = pl.CostEstimate(
        flops=2 * N * HW * Cin * Cout,
        transcendentals=0,
        bytes_accessed=(Cin + Cout) * N * HW * bytes_per_elem
        + (Cout * Cin + Cout) * bytes_per_elem,
    )

    out = pl.pallas_call(
        outconv_kernel,
        out_shape=jax.ShapeDtypeStruct((N, Cout, hw_alloc), x_nchw.dtype),
        grid_spec=pltpu.PrefetchScalarGridSpec(
            num_scalar_prefetch=0,
            grid=grid,
            in_specs=[
                pl.BlockSpec((n_b, Cin, t_hw), lambda bi, j: (bi, 0, j)),  # x tile
                pl.BlockSpec((Cout, Cin), lambda bi, j: (0, 0)),           # weights (resident)
                pl.BlockSpec((Cout, 1), lambda bi, j: (0, 0)),             # bias (resident)
            ],
            out_specs=pl.BlockSpec((n_b, Cout, t_hw), lambda bi, j: (bi, 0, j)),
        ),
        compiler_params=pltpu.CompilerParams(
            dimension_semantics=("parallel", "parallel"),
            vmem_limit_bytes=_VMEM_LIMIT,
        ),
        cost_estimate=cost,
    )(x2, w2, b2)

    if hw_alloc != HW:
        out = out[:, :, :HW]
    return out.reshape(N, Cout, H, W)


def outconv_ref(x_nchw, weight, bias):
    """Pure-JAX reference identical to PyTorch nn.Conv2d(kernel_size=1)."""
    y = jax.lax.conv_general_dilated(
        x_nchw, weight, window_strides=(1, 1), padding="VALID",
        dimension_numbers=("NCHW", "OIHW", "NCHW"))
    return y + bias.reshape(1, -1, 1, 1)


if __name__ == "__main__":
    # Shapes consistent with OutConv in a UNet head: many input channels,
    # few output channels (n_classes), small spatial extent.
    N, Cin, Cout, H, W = 2, 64, 4, 16, 16

    key = jax.random.PRNGKey(0)
    k_x, k_w, k_b = jax.random.split(key, 3)

    x = jax.random.normal(k_x, (N, Cin, H, W), dtype=jnp.float32)
    # PyTorch Conv2d(kernel_size=1) weight shape: (Cout, Cin, 1, 1), bias: (Cout,)
    weight = jax.random.normal(k_w, (Cout, Cin, 1, 1), dtype=jnp.float32) * 0.1
    bias = jax.random.normal(k_b, (Cout,), dtype=jnp.float32) * 0.1

    out = outconv(x, weight, bias)
    out = jax.block_until_ready(out)

    ref = outconv_ref(x, weight, bias)
    ref = jax.block_until_ready(ref)

    np.testing.assert_allclose(np.asarray(out), np.asarray(ref),
                               rtol=1e-5, atol=1e-5)
    assert out.shape == (N, Cout, H, W)
    print("KERNEL_OK")
</pallas_src>

<mosaic_0001>
module attributes {stable_mosaic.version = 11 : i64} {
  func.func @outconv_kernel(%arg0: i32, %arg1: i32, %arg2: memref<2x64x256xf32, #tpu.memory_space<vmem>>, %arg3: memref<4x64xf32, #tpu.memory_space<vmem>>, %arg4: memref<4x1xf32, #tpu.memory_space<vmem>>, %arg5: memref<2x4x256xf32, #tpu.memory_space<vmem>>) attributes {dimension_semantics = [#tpu.dimension_semantics<parallel>, #tpu.dimension_semantics<parallel>], iteration_bounds = array<i64: 1, 1>, scalar_prefetch = 0 : i64, scratch_operands = 0 : i64, tpu.core_type = #tpu.core_type<tc>, window_params = [{transform_indices = @transform_0, window_bounds = array<i64: 2, 64, 256>}, {pipeline_mode = #tpu.pipeline_mode<synchronous>, transform_indices = @transform_1, window_bounds = array<i64: 4, 64>}, {pipeline_mode = #tpu.pipeline_mode<synchronous>, transform_indices = @transform_2, window_bounds = array<i64: 4, 1>}, {transform_indices = @transform_3, window_bounds = array<i64: 2, 4, 256>}]} {
    %c0 = arith.constant 0 : index
    %c0_0 = arith.constant 0 : index
    %0 = vector.load %arg3[%c0, %c0_0] : memref<4x64xf32, #tpu.memory_space<vmem>>, vector<4x64xf32>
    %c0_1 = arith.constant 0 : index
    %c0_2 = arith.constant 0 : index
    %1 = vector.load %arg4[%c0_1, %c0_2] : memref<4x1xf32, #tpu.memory_space<vmem>>, vector<4x1xf32>
    %c0_3 = arith.constant 0 : index
    %c0_4 = arith.constant 0 : index
    %c0_5 = arith.constant 0 : index
    %2 = vector.load %arg2[%c0_3, %c0_4, %c0_5] : memref<2x64x256xf32, #tpu.memory_space<vmem>>, vector<1x64x256xf32>
    %3 = vector.shape_cast %2 : vector<1x64x256xf32> to vector<64x256xf32>
    %cst = arith.constant dense<0.000000e+00> : vector<4x256xf32>
    %4 = tpu.matmul %0, %3, %cst {dimension_numbers = #tpu.dot_dimension_numbers<[1], [0], [0], [1], [0, 0, 1, 1], [], []>} : vector<4x64xf32>, vector<64x256xf32>, vector<4x256xf32> -> vector<4x256xf32>
    %5 = vector.broadcast %1 : vector<4x1xf32> to vector<4x256xf32>
    %6 = arith.addf %4, %5 : vector<4x256xf32>
    %c0_6 = arith.constant 0 : index
    %c0_7 = arith.constant 0 : index
    %c0_8 = arith.constant 0 : index
    %7 = vector.load %arg5[%c0_6, %c0_7, %c0_8] : memref<2x4x256xf32, #tpu.memory_space<vmem>>, vector<1x4x256xf32>
    %8 = vector.shape_cast %7 : vector<1x4x256xf32> to vector<4x256xf32>
    %9 = vector.shape_cast %6 : vector<4x256xf32> to vector<1x4x256xf32>
    tpu.vector_store %arg5[%c0_6, %c0_7, %c0_8], %9 {strides = array<i32>} : memref<2x4x256xf32, #tpu.memory_space<vmem>>, vector<1x4x256xf32>,
    %c1 = arith.constant 1 : index
    %c0_9 = arith.constant 0 : index
    %c0_10 = arith.constant 0 : index
    %10 = vector.load %arg2[%c1, %c0_9, %c0_10] : memref<2x64x256xf32, #tpu.memory_space<vmem>>, vector<1x64x256xf32>
    %11 = vector.shape_cast %10 : vector<1x64x256xf32> to vector<64x256xf32>
    %cst_11 = arith.constant dense<0.000000e+00> : vector<4x256xf32>
    %12 = tpu.matmul %0, %11, %cst_11 {dimension_numbers = #tpu.dot_dimension_numbers<[1], [0], [0], [1], [0, 0, 1, 1], [], []>} : vector<4x64xf32>, vector<64x256xf32>, vector<4x256xf32> -> vector<4x256xf32>
    %13 = vector.broadcast %1 : vector<4x1xf32> to vector<4x256xf32>
    %14 = arith.addf %12, %13 : vector<4x256xf32>
    %c1_12 = arith.constant 1 : index
    %c0_13 = arith.constant 0 : index
    %c0_14 = arith.constant 0 : index
    %15 = vector.load %arg5[%c1_12, %c0_13, %c0_14] : memref<2x4x256xf32, #tpu.memory_space<vmem>>, vector<1x4x256xf32>
    %16 = vector.shape_cast %15 : vector<1x4x256xf32> to vector<4x256xf32>
    %17 = vector.shape_cast %14 : vector<4x256xf32> to vector<1x4x256xf32>
    tpu.vector_store %arg5[%c1_12, %c0_13, %c0_14], %17 {strides = array<i32>} : memref<2x4x256xf32, #tpu.memory_space<vmem>>, vector<1x4x256xf32>,
    return
  }
  func.func @transform_0(%arg0: i32, %arg1: i32) -> (i32, i32, i32) {
    %c0_i32 = arith.constant 0 : i32
    %c0_i32_0 = arith.constant 0 : i32
    return %arg0, %c0_i32, %arg1 : i32, i32, i32
  }
  func.func @transform_1(%arg0: i32, %arg1: i32) -> (i32, i32) {
    %c0_i32 = arith.constant 0 : i32
    %c0_i32_0 = arith.constant 0 : i32
    %c0_i32_1 = arith.constant 0 : i32
    return %c0_i32, %c0_i32_0 : i32, i32
  }
  func.func @transform_2(%arg0: i32, %arg1: i32) -> (i32, i32) {
    %c0_i32 = arith.constant 0 : i32
    %c0_i32_0 = arith.constant 0 : i32
    %c0_i32_1 = arith.constant 0 : i32
    return %c0_i32, %c0_i32_0 : i32, i32
  }
  func.func @transform_3(%arg0: i32, %arg1: i32) -> (i32, i32, i32) {
    %c0_i32 = arith.constant 0 : i32
    %c0_i32_0 = arith.constant 0 : i32
    return %arg0, %c0_i32, %arg1 : i32, i32, i32
  }
}

</mosaic_0001>

<llo_original>
// kernel: tpu_custom_call.1
$region0: #{tpu_custom_call.1}
  #allocation0 [shape = 'u32[]', space=smem, size = 0x4, offset = 0x4, fixed_abs, tag = 'smem constant byte address 0x4 - core index']
  #allocation1 [shape = 'u32[144,128]{1,0:T(1,128)}', space=vmem, size = 0x12000, scoped, tag = 'internal scratch']
  %s0 = inlined_call_operand.hbm [shape: f32[2,64,256], index: 0, kind: input, shape index: {}]
  %s1 = inlined_call_operand.vmem [shape: f32[4,64], index: 1, kind: input, shape index: {}]
  %s2 = inlined_call_operand.vmem [shape: f32[4,1], index: 2, kind: input, shape index: {}]
  %s3 = inlined_call_operand.hbm [shape: f32[2,4,256], index: 3, kind: output, shape index: {}]
  %s4 = sld [smem:[#allocation0]]
  $region26: #{tpu_custom_call.1} parent=0
    _
  %s6 = ssub.s32 1, %s4
  %s7 = scalar_select 0, %s6, %s4
  $region1: #{tpu_custom_call.1} parent=0
    #allocation2 [shape = 'u8[131072]{0}', space=vmem, size = 0x20000, scoped, tag = 'input window, operand 0, single buffered']
    #allocation3 [shape = 's32[1]{0}', space=sflag, size = 0x4, scoped, tag = 'scoped memory for tpu_custom_call.1']
    #allocation4 [shape = 's32[1]{0}', space=sflag, size = 0x4, scoped, tag = 'scoped memory for tpu_custom_call.1']
    #allocation5 [shape = 'u8[8192]{0}', space=vmem, size = 0x2000, scoped, tag = 'output window, operand 0, single buffered']
    %8 = vsyncpa [#allocation3], 0
    %9 = vsyncpa [#allocation4], 0
    // Predicated region
    $region2: #{tpu_custom_call.1} parent=1 // pred_check
      _
    $region3: #{tpu_custom_call.1} parent=1 // pred_check_branch
      %11 = sbr.rel (0) target = $region5
    $region4: #{tpu_custom_call.1} parent=1 // pred_region
      %s13 = ssub.s32 4096, 4096
      %14 = vsyncadd [#allocation3], %s13
      %s15 = sshll.u32 [#allocation2], 4
      %s16 = int_to_ptr.vmem [resolvable:$true] %s15
      %21 = dma.hbm_to_vmem [thread:$0]  %s0, 4096, %s16, [#allocation3], 256, 256, 16
    $region5: #{tpu_custom_call.1} parent=1 // pred_fallthru
      _
    // Predicated region
    $region6: #{tpu_custom_call.1} parent=1 // pred_check
      _
    $region7: #{tpu_custom_call.1} parent=1 // pred_check_branch
      %23 = sbr.rel (0) target = $region9
    $region8: #{tpu_custom_call.1} parent=1 // pred_region
      _
    $region9: #{tpu_custom_call.1} parent=1 // pred_fallthru
      _
    // Predicated region
    $region10: #{tpu_custom_call.1} parent=1 // pred_check
      _
    $region11: #{tpu_custom_call.1} parent=1 // pred_check_branch
      %25 = sbr.rel (0) target = $region13
    $region12: #{tpu_custom_call.1} parent=1 // pred_region
      _
    $region13: #{tpu_custom_call.1} parent=1 // pred_fallthru
      _
    // Predicated region
    $region14: #{tpu_custom_call.1} parent=1 // pred_check
      _
    $region15: #{tpu_custom_call.1} parent=1 // pred_check_branch
      %27 = sbr.rel (0) target = $region17
    $region16: #{tpu_custom_call.1} parent=1 // pred_region
      %28 = dma.done [#allocation3], 4096
    $region17: #{tpu_custom_call.1} parent=1 // pred_fallthru
      _
    %v29 = vld [vmem:[%s1] sm:$0xf]
    %v30 = vld [vmem:[%s2] sm:$0xf]
    %v31 = vld [vmem:[#allocation2] sm:$0xff]
    %v32 = vld [vmem:[#allocation2 + $0x8] sm:$0xff]
    %v33 = vld [vmem:[#allocation2 + $0x10] sm:$0xff]
    %v34 = vld [vmem:[#allocation2 + $0x18] sm:$0xff]
    %v35 = vld [vmem:[#allocation2 + $0x20] sm:$0xff]
    %v36 = vld [vmem:[#allocation2 + $0x28] sm:$0xff]
    %v37 = vld [vmem:[#allocation2 + $0x30] sm:$0xff]
    %v38 = vld [vmem:[#allocation2 + $0x38] sm:$0xff]
    %v39 = vld [vmem:[#allocation2 + $0x40] sm:$0xff]
    %v40 = vld [vmem:[#allocation2 + $0x48] sm:$0xff]
    %v41 = vld [vmem:[#allocation2 + $0x50] sm:$0xff]
    %v42 = vld [vmem:[#allocation2 + $0x58] sm:$0xff]
    %v43 = vld [vmem:[#allocation2 + $0x60] sm:$0xff]
    %v44 = vld [vmem:[#allocation2 + $0x68] sm:$0xff]
    %v45 = vld [vmem:[#allocation2 + $0x70] sm:$0xff]
    %v46 = vld [vmem:[#allocation2 + $0x78] sm:$0xff]
    %48 = vset.pattern.permute.xlu0 0
    %49 = vperm.xlu0 %48, %v30
    %v50 = vpop.permute.xlu0 %49
    %vm52 = vcmask 523264
    %v54 = vsel %vm52, %v29, 0
    %56 = vmatprep.subr.mxu0 %v32
    %57 = vmatpush1.msra.mxu0 %v31
    %58 = vmatprep.subr.mxu0 %v34
    %59 = vmatpush1.msra.mxu0 %v33
    %60 = vmatprep.subr.mxu0 %v36
    %61 = vmatpush1.msra.mxu0 %v35
    %62 = vmatprep.subr.mxu0 %v38
    %63 = vmatpush1.msra.mxu0 %v37
    %64 = vmatprep.subr.mxu0 %v40
    %65 = vmatpush1.msra.mxu0 %v39
    %66 = vmatprep.subr.mxu0 %v42
    %67 = vmatpush1.msra.mxu0 %v41
    %68 = vmatprep.subr.mxu0 %v44
    %69 = vmatpush1.msra.mxu0 %v43
    %70 = vmatprep.subr.mxu0 %v46
    %71 = vmatpush1.msra.mxu0 %v45
    %72 = vmatprep.subr.mxu0 0.0
    %73 = vmatpush1.msra.mxu0 0.0
    %74 = vmatprep.subr.mxu0 0.0
    %75 = vmatpush1.msra.mxu0 0.0
    %76 = vmatprep.subr.mxu0 0.0
    %77 = vmatpush1.msra.mxu0 0.0
    %78 = vmatprep.subr.mxu0 0.0
    %79 = vmatpush1.msra.mxu0 0.0
    %80 = vmatprep.subr.mxu0 0.0
    %81 = vmatpush1.msra.mxu0 0.0
    %82 = vmatprep.subr.mxu0 0.0
    %83 = vmatpush1.msra.mxu0 0.0
    %84 = vmatprep.subr.mxu0 0.0
    %85 = vmatpush1.msra.mxu0 0.0
    %86 = vmatprep.subr.mxu0 0.0
    %87 = vmatpush1.msra.mxu0 0.0
    %88 = vmatprep.subr.mxu0 0.0
    %89 = vmatpush1.msra.mxu0 0.0
    %90 = vmatprep.subr.mxu0 0.0
    %91 = vmatpush1.msra.mxu0 0.0
    %92 = vmatprep.subr.mxu0 0.0
    %93 = vmatpush1.msra.mxu0 0.0
    %94 = vmatprep.subr.mxu0 0.0
    %95 = vmatpush1.msra.mxu0 0.0
    %96 = vmatprep.subr.mxu0 0.0
    %97 = vmatpush1.msra.mxu0 0.0
    %98 = vmatprep.subr.mxu0 0.0
    %99 = vmatpush1.msra.mxu0 0.0
    %100 = vmatprep.subr.mxu0 0.0
    %101 = vmatpush1.msra.mxu0 0.0
    %102 = vmatprep.subr.mxu0 0.0
    %103 = vmatpush1.msra.mxu0 0.0
    %104 = vmatprep.subr.mxu0 0.0
    %105 = vmatpush1.msra.mxu0 0.0
    %106 = vmatprep.subr.mxu0 0.0
    %107 = vmatpush1.msra.mxu0 0.0
    %108 = vmatprep.subr.mxu0 0.0
    %109 = vmatpush1.msra.mxu0 0.0
    %110 = vmatprep.subr.mxu0 0.0
    %111 = vmatpush1.msra.mxu0 0.0
    %112 = vmatprep.subr.mxu0 0.0
    %113 = vmatpush1.msra.mxu0 0.0
    %114 = vmatprep.subr.mxu0 0.0
    %115 = vmatpush1.msra.mxu0 0.0
    %116 = vmatprep.subr.mxu0 0.0
    %117 = vmatpush1.msra.mxu0 0.0
    %118 = vmatprep.subr.mxu0 0.0
    %119 = vmatpush1.msra.mxu0 0.0
    %120 = vmatprep.mubr.f32.mxu0 0.0
    %121 = vmatmul.mubr.f32.gmra.mrb[0].mxu0 %v54
    %v122 = vpop.f32.mrb[0].mxu0
    %v123 = vadd.f32 %v50, %v122
    %v124 = vpop.f32.mrb[0].mxu0
    %v125 = vadd.f32 %v50, %v124
    %126 = vdwg.mxu0
    %v129 = vcombine.low %v123, %v125
    %131 = vst [vmem:[#allocation5] sm:$0xff] %v129
    %s132 = scalar_lea.vmem [#allocation2], 128
    %v133 = vld [vmem:[%s132] sm:$0xff]
    %v134 = vld [vmem:[%s132 + $0x8] sm:$0xff]
    %v135 = vld [vmem:[%s132 + $0x10] sm:$0xff]
    %v136 = vld [vmem:[%s132 + $0x18] sm:$0xff]
    %v137 = vld [vmem:[%s132 + $0x20] sm:$0xff]
    %v138 = vld [vmem:[%s132 + $0x28] sm:$0xff]
    %v139 = vld [vmem:[%s132 + $0x30] sm:$0xff]
    %v140 = vld [vmem:[%s132 + $0x38] sm:$0xff]
    %v141 = vld [vmem:[%s132 + $0x40] sm:$0xff]
    %v142 = vld [vmem:[%s132 + $0x48] sm:$0xff]
    %v143 = vld [vmem:[%s132 + $0x50] sm:$0xff]
    %v144 = vld [vmem:[%s132 + $0x58] sm:$0xff]
    %v145 = vld [vmem:[%s132 + $0x60] sm:$0xff]
    %v146 = vld [vmem:[%s132 + $0x68] sm:$0xff]
    %v147 = vld [vmem:[%s132 + $0x70] sm:$0xff]
    %v148 = vld [vmem:[%s132 + $0x78] sm:$0xff]
    %149 = vmatprep.subr.mxu0 %v134
    %150 = vmatpush1.msra.mxu0 %v133
    %151 = vmatprep.subr.mxu0 %v136
    %152 = vmatpush1.msra.mxu0 %v135
    %153 = vmatprep.subr.mxu0 %v138
    %154 = vmatpush1.msra.mxu0 %v137
    %155 = vmatprep.subr.mxu0 %v140
    %156 = vmatpush1.msra.mxu0 %v139
    %157 = vmatprep.subr.mxu0 %v142
    %158 = vmatpush1.msra.mxu0 %v141
    %159 = vmatprep.subr.mxu0 %v144
    %160 = vmatpush1.msra.mxu0 %v143
    %161 = vmatprep.subr.mxu0 %v146
    %162 = vmatpush1.msra.mxu0 %v145
    %163 = vmatprep.subr.mxu0 %v148
    %164 = vmatpush1.msra.mxu0 %v147
    %165 = vmatprep.subr.mxu0 0.0
    %166 = vmatpush1.msra.mxu0 0.0
    %167 = vmatprep.subr.mxu0 0.0
    %168 = vmatpush1.msra.mxu0 0.0
    %169 = vmatprep.subr.mxu0 0.0
    %170 = vmatpush1.msra.mxu0 0.0
    %171 = vmatprep.subr.mxu0 0.0
    %172 = vmatpush1.msra.mxu0 0.0
    %173 = vmatprep.subr.mxu0 0.0
    %174 = vmatpush1.msra.mxu0 0.0
    %175 = vmatprep.subr.mxu0 0.0
    %176 = vmatpush1.msra.mxu0 0.0
    %177 = vmatprep.subr.mxu0 0.0
    %178 = vmatpush1.msra.mxu0 0.0
    %179 = vmatprep.subr.mxu0 0.0
    %180 = vmatpush1.msra.mxu0 0.0
    %181 = vmatprep.subr.mxu0 0.0
    %182 = vmatpush1.msra.mxu0 0.0
    %183 = vmatprep.subr.mxu0 0.0
    %184 = vmatpush1.msra.mxu0 0.0
    %185 = vmatprep.subr.mxu0 0.0
    %186 = vmatpush1.msra.mxu0 0.0
    %187 = vmatprep.subr.mxu0 0.0
    %188 = vmatpush1.msra.mxu0 0.0
    %189 = vmatprep.subr.mxu0 0.0
    %190 = vmatpush1.msra.mxu0 0.0
    %191 = vmatprep.subr.mxu0 0.0
    %192 = vmatpush1.msra.mxu0 0.0
    %193 = vmatprep.subr.mxu0 0.0
    %194 = vmatpush1.msra.mxu0 0.0
    %195 = vmatprep.subr.mxu0 0.0
    %196 = vmatpush1.msra.mxu0 0.0
    %197 = vmatprep.subr.mxu0 0.0
    %198 = vmatpush1.msra.mxu0 0.0
    %199 = vmatprep.subr.mxu0 0.0
    %200 = vmatpush1.msra.mxu0 0.0
    %201 = vmatprep.subr.mxu0 0.0
    %202 = vmatpush1.msra.mxu0 0.0
    %203 = vmatprep.subr.mxu0 0.0
    %204 = vmatpush1.msra.mxu0 0.0
    %205 = vmatprep.subr.mxu0 0.0
    %206 = vmatpush1.msra.mxu0 0.0
    %207 = vmatprep.subr.mxu0 0.0
    %208 = vmatpush1.msra.mxu0 0.0
    %209 = vmatprep.subr.mxu0 0.0
    %210 = vmatpush1.msra.mxu0 0.0
    %211 = vmatprep.subr.mxu0 0.0
    %212 = vmatpush1.msra.mxu0 0.0
    %213 = vmatprep.mubr.f32.mxu0 0.0
    %214 = vmatmul.mubr.f32.gmra.mrb[0].mxu0 %v54
    %v215 = vpop.f32.mrb[0].mxu0
    %v216 = vadd.f32 %v50, %v215
    %v217 = vpop.f32.mrb[0].mxu0
    %v218 = vadd.f32 %v50, %v217
    %219 = vdwg.mxu0
    %v222 = vcombine.low %v216, %v218
    %s224 = scalar_lea.vmem [#allocation5], 8
    %225 = vst [vmem:[%s224] sm:$0xff] %v222
    // Predicated region
    $region18: #{tpu_custom_call.1} parent=1 // pred_check
      _
    $region19: #{tpu_custom_call.1} parent=1 // pred_check_branch
      %227 = sbr.rel (0) target = $region21
    $region20: #{tpu_custom_call.1} parent=1 // pred_region
      %s229 = ssub.s32 256, 256
      %230 = vsyncadd [#allocation4], %s229
      %s231 = sshll.u32 [#allocation5], 4
      %s232 = int_to_ptr.vmem [resolvable:$true] %s231
      %237 = dma.vmem_to_hbm [thread:$0]  %s232, 256, %s3, [#allocation4], 128, 128, 8
    $region21: #{tpu_custom_call.1} parent=1 // pred_fallthru
      _
    // Predicated region
    $region22: #{tpu_custom_call.1} parent=1 // pred_check
      _
    $region23: #{tpu_custom_call.1} parent=1 // pred_check_branch
      %239 = sbr.rel (0) target = $region25
    $region24: #{tpu_custom_call.1} parent=1 // pred_region
      %240 = dma.done [#allocation4], 256
    $region25: #{tpu_custom_call.1} parent=1 // pred_fallthru
      _
    %241 = vsyncpa [#allocation3], 1
    %242 = vsyncpa [#allocation4], 1

</llo_original>
